<compile_context>
chip_gen: v7x
topology: tpu7x:2x2x1
jax: 0.10.0
libtpu: 0.0.40
codegen_flags: <defaults>
</compile_context>

<pallas_src>
import functools

import jax
import jax.numpy as jnp
from jax import lax
from jax.experimental import pallas as pl
from jax.experimental.pallas import tpu as pltpu


def _round_up(x, m):
    return (x + m - 1) // m * m


def _reward_partial_kernel(inp_ref, seq_ref, w_ref, out_ref, acc_ref, *, n_rows):
    # inp_ref: (RT, VT) native dtype   seq_ref: (RT, 1) int32
    # w_ref  : (RT, 1) f32 = -(reward * mask)
    # out_ref: (1, 8, 128) f32 partial numerator for this row tile
    # acc_ref: (RT, 1) f32 per-row gathered accumulator (scratch)
    i = pl.program_id(0)          # row-tile index ("parallel")
    v = pl.program_id(1)          # vocab-tile index ("arbitrary", reduction)

    RT, VT = inp_ref.shape

    @pl.when(v == 0)
    def _():
        acc_ref[...] = jnp.zeros_like(acc_ref)

    inp = inp_ref[...]                                        # native dtype
    seq_local = seq_ref[...] - v * VT                         # (RT,1) cheap op
    lane_ids = lax.broadcasted_iota(jnp.int32, (1, VT), 1)    # lane-only iota

    # One-hot gather over this vocab slice. jnp.where keeps unselected lanes at
    # exactly 0 (NaN/-inf safe), so the lane-sum is exact even in bf16. Pad
    # lanes of a ragged last vocab tile have lane ids >= V-v*VT and never match.
    selected = jnp.where(lane_ids == seq_local, inp, 0)       # (RT, VT)
    gathered = jnp.sum(selected, axis=-1, keepdims=True)      # (RT, 1)
    acc_ref[...] += gathered.astype(jnp.float32)

    @pl.when(v == pl.num_programs(1) - 1)
    def _():
        # Finalize once per row tile: weight, kill padded rows, reduce, splat.
        row_ids = lax.broadcasted_iota(jnp.int32, (RT, 1), 0) + i * RT
        contrib = jnp.where(row_ids < n_rows, acc_ref[...] * w_ref[...], 0.0)
        total = jnp.sum(contrib)
        out_ref[...] = jnp.full(out_ref.shape, total, dtype=jnp.float32)


def reward_criterion(inp, seq, reward, *, max_rows_tile=256, max_vocab_tile=8192):
    B, T, V = inp.shape
    N = B * T

    seq = seq.astype(jnp.int32)
    rew = reward.astype(jnp.float32)

    # Shifted mask computed once in the wrapper (O(B*T) work; avoids the
    # tile-boundary hazard of shifting inside a tiled kernel).
    maskf = (seq > 0).astype(jnp.float32)
    mask = jnp.concatenate([jnp.ones((B, 1), jnp.float32), maskf[:, :-1]], axis=1)
    weight = -(rew * mask)                      # numerator = sum(gathered * weight)
    den = jnp.sum(mask)

    inp2 = inp.reshape(N, V)                    # NATIVE dtype streamed to the kernel
    seq2 = seq.reshape(N, 1)
    w2 = weight.reshape(N, 1)

    # ---- row tiling ----------------------------------------------------------
    if N <= max_rows_tile:
        if N >= 64:
            # ensure >= 2 row tiles so the "parallel" axis can split across both
            # TensorCores on v7x (one extra grid step is noise on v5e/v6e)
            RT = _round_up(-(-N // 2), 8)
        else:
            RT = N                              # full-dim block (always legal)
    else:
        RT = max(8, _round_up(max_rows_tile, 8))
    grid_rows = -(-N // RT)

    # ---- vocab tiling --------------------------------------------------------
    itemsize = jnp.dtype(inp.dtype).itemsize
    budget = 28 * 1024 * 1024                   # double-buffered input budget (v7x-safe)
    max_vt = max(128, _round_up(max_vocab_tile, 128))
    while max_vt > 128 and 2 * RT * max_vt * itemsize > budget:
        max_vt = max(128, _round_up(max_vt // 2, 128))
    if _round_up(V, 128) <= max_vt:
        VT = V                                  # whole vocab as one full-dim block
    else:
        VT = max_vt                             # 128-aligned; ragged last tile is fine
    grid_v = -(-V // VT)

    # ---- VMEM limit derived from the chosen tile (v7x has only 64 MiB) -------
    vmem_bytes = (2 * RT * VT * itemsize        # double-buffered input stream
                  + 2 * 2 * RT * 4              # seq + weight blocks
                  + 2 * 8 * 128 * 4             # output block
                  + RT * 4)                     # f32 accumulator scratch
    vmem_limit = int(min(max(vmem_bytes + (2 << 20), 8 << 20), 48 << 20))

    cost = pl.CostEstimate(
        flops=3 * N * V,                        # compare + select + add per element
        transcendentals=0,
        bytes_accessed=N * V * itemsize + N * 8 + grid_rows * 8 * 128 * 4,
    )

    partials = pl.pallas_call(
        functools.partial(_reward_partial_kernel, n_rows=N),
        out_shape=jax.ShapeDtypeStruct((grid_rows, 8, 128), jnp.float32),
        grid_spec=pltpu.PrefetchScalarGridSpec(
            num_scalar_prefetch=0,
            grid=(grid_rows, grid_v),           # reduction (vocab) axis last
            in_specs=[
                pl.BlockSpec((RT, VT), lambda i, v: (i, v)),
                pl.BlockSpec((RT, 1), lambda i, v: (i, 0)),
                pl.BlockSpec((RT, 1), lambda i, v: (i, 0)),
            ],
            out_specs=pl.BlockSpec((1, 8, 128), lambda i, v: (i, 0, 0)),
            scratch_shapes=[pltpu.VMEM((RT, 1), jnp.float32)],
        ),
        compiler_params=pltpu.CompilerParams(
            dimension_semantics=("parallel", "arbitrary"),
            vmem_limit_bytes=vmem_limit,
        ),
        cost_estimate=cost,
    )(inp2, seq2, w2)

    num = jnp.sum(partials[:, 0, 0])            # per-row-tile partial numerators
    return num / den


def _reference(inp, seq, reward):
    # Pure-JAX reference mirroring the PyTorch forward (f32 accumulation).
    gathered = jnp.take_along_axis(inp, seq[:, :, None], axis=2)[:, :, 0]
    gathered = gathered.astype(jnp.float32)
    maskf = (seq > 0).astype(jnp.float32)
    mask = jnp.concatenate(
        [jnp.ones((seq.shape[0], 1), jnp.float32), maskf[:, :-1]], axis=1)
    return jnp.sum(-gathered * reward.astype(jnp.float32) * mask) / jnp.sum(mask)


if __name__ == "__main__":
    key = jax.random.PRNGKey(0)

    # ---- test 1: small shapes, f32, single-block grid ------------------------
    k1, k2, k3 = jax.random.split(key, 3)
    B, T, V = 2, 8, 32
    inp = jax.nn.log_softmax(jax.random.normal(k1, (B, T, V), jnp.float32), axis=-1)
    seq = jax.random.randint(k2, (B, T), 0, V, dtype=jnp.int32)
    seq = seq.at[0, 5:].set(0).at[1, 6:].set(0)      # exercise the shifted mask
    reward = jax.random.normal(k3, (B, T), jnp.float32)

    out = jax.block_until_ready(reward_criterion(inp, seq, reward))
    ref = _reference(inp, seq, reward)
    assert jnp.allclose(out, ref, atol=1e-5, rtol=1e-5), (out, ref)

    # ---- test 2: bf16 streaming, ragged multi-tile grid ----------------------
    # N=160 rows -> 3 row tiles of 64 (last ragged); V=520 with max_vocab_tile=256
    # -> 3 vocab tiles (last ragged: 8 valid lanes). Exercises all masking paths.
    k4, k5, k6 = jax.random.split(jax.random.PRNGKey(1), 3)
    B2, T2, V2 = 2, 80, 520
    inp2 = jax.nn.log_softmax(
        jax.random.normal(k4, (B2, T2, V2), jnp.float32), axis=-1
    ).astype(jnp.bfloat16)
    seq2 = jax.random.randint(k5, (B2, T2), 0, V2, dtype=jnp.int32)
    seq2 = seq2.at[0, 60:].set(0).at[1, 55:].set(0)
    reward2 = jax.random.normal(k6, (B2, T2), jnp.float32)

    out2 = jax.block_until_ready(
        reward_criterion(inp2, seq2, reward2, max_rows_tile=64, max_vocab_tile=256))
    ref2 = _reference(inp2, seq2, reward2)
    assert jnp.allclose(out2, ref2, atol=2e-3, rtol=2e-3), (out2, ref2)

    # ---- test 3: dual-TC row split + non-128-multiple full-dim vocab block ----
    k7, k8, k9 = jax.random.split(jax.random.PRNGKey(2), 3)
    B3, T3, V3 = 2, 64, 300
    inp3 = jax.nn.log_softmax(jax.random.normal(k7, (B3, T3, V3), jnp.float32), axis=-1)
    seq3 = jax.random.randint(k8, (B3, T3), 0, V3, dtype=jnp.int32)
    seq3 = seq3.at[0, 40:].set(0).at[1, 50:].set(0)
    reward3 = jax.random.normal(k9, (B3, T3), jnp.float32)

    out3 = jax.block_until_ready(reward_criterion(inp3, seq3, reward3))
    ref3 = _reference(inp3, seq3, reward3)
    assert jnp.allclose(out3, ref3, atol=1e-5, rtol=1e-5), (out3, ref3)

    print("KERNEL_OK")
</pallas_src>

<mosaic_0001>
module attributes {stable_mosaic.version = 11 : i64} {
  func.func @_reward_partial_kernel(%arg0: i32, %arg1: i32, %arg2: memref<16x32xf32, #tpu.memory_space<vmem>>, %arg3: memref<16x1xi32, #tpu.memory_space<vmem>>, %arg4: memref<16x1xf32, #tpu.memory_space<vmem>>, %arg5: memref<1x8x128xf32, #tpu.memory_space<vmem>>, %arg6: memref<16x1xf32, #tpu.memory_space<vmem>>) attributes {dimension_semantics = [#tpu.dimension_semantics<parallel>, #tpu.dimension_semantics<arbitrary>], iteration_bounds = array<i64: 1, 1>, scalar_prefetch = 0 : i64, scratch_operands = 1 : i64, tpu.core_type = #tpu.core_type<tc>, window_params = [{transform_indices = @transform_0, window_bounds = array<i64: 16, 32>}, {transform_indices = @transform_1, window_bounds = array<i64: 16, 1>}, {transform_indices = @transform_2, window_bounds = array<i64: 16, 1>}, {transform_indices = @transform_3, window_bounds = array<i64: 1, 8, 128>}]} {
    %c0_i32 = arith.constant 0 : i32
    %0 = arith.cmpi eq, %arg1, %c0_i32 : i32
    %1 = arith.extui %0 : i1 to i32
    %c0_i32_0 = arith.constant 0 : i32
    %2 = arith.cmpi ne, %1, %c0_i32_0 : i32
    scf.if %2 {
      %cst_11 = arith.constant 0.000000e+00 : f32
      %23 = vector.broadcast %cst_11 : f32 to vector<16x1xf32>
      %c0_12 = arith.constant 0 : index
      %c0_13 = arith.constant 0 : index
      %24 = vector.load %arg6[%c0_12, %c0_13] : memref<16x1xf32, #tpu.memory_space<vmem>>, vector<16x1xf32>
      tpu.vector_store %arg6[%c0_12, %c0_13], %23 {strides = array<i32>} : memref<16x1xf32, #tpu.memory_space<vmem>>, vector<16x1xf32>,
    } else {
    }
    %c0 = arith.constant 0 : index
    %c0_1 = arith.constant 0 : index
    %3 = vector.load %arg2[%c0, %c0_1] : memref<16x32xf32, #tpu.memory_space<vmem>>, vector<16x32xf32>
    %c0_2 = arith.constant 0 : index
    %c0_3 = arith.constant 0 : index
    %4 = vector.load %arg3[%c0_2, %c0_3] : memref<16x1xi32, #tpu.memory_space<vmem>>, vector<16x1xi32>
    %c32_i32 = arith.constant 32 : i32
    %5 = arith.muli %arg1, %c32_i32 : i32
    %6 = vector.broadcast %5 : i32 to vector<16x1xi32>
    %7 = arith.subi %4, %6 : vector<16x1xi32>
    %8 = tpu.iota {dimensions = array<i32: 1>} : vector<1x32xi32>
    %9 = vector.broadcast %8 : vector<1x32xi32> to vector<16x32xi32>
    %10 = vector.broadcast %7 : vector<16x1xi32> to vector<16x32xi32>
    %11 = arith.cmpi eq, %9, %10 : vector<16x32xi32>
    %c0_i32_4 = arith.constant 0 : i32
    %12 = arith.sitofp %c0_i32_4 : i32 to f32
    %13 = vector.broadcast %12 : f32 to vector<16x32xf32>
    %14 = arith.select %11, %3, %13 : vector<16x32xi1>, vector<16x32xf32>
    %cst = arith.constant dense<0.000000e+00> : vector<16xf32>
    %15 = vector.multi_reduction <add>, %14, %cst [1] : vector<16x32xf32> to vector<16xf32>
    %16 = vector.shape_cast %15 : vector<16xf32> to vector<16x1xf32>
    %c0_5 = arith.constant 0 : index
    %c0_6 = arith.constant 0 : index
    %17 = vector.load %arg6[%c0_5, %c0_6] : memref<16x1xf32, #tpu.memory_space<vmem>>, vector<16x1xf32>
    %18 = arith.addf %17, %16 : vector<16x1xf32>
    %c0_7 = arith.constant 0 : index
    %c0_8 = arith.constant 0 : index
    %19 = vector.load %arg6[%c0_7, %c0_8] : memref<16x1xf32, #tpu.memory_space<vmem>>, vector<16x1xf32>
    tpu.vector_store %arg6[%c0_7, %c0_8], %18 {strides = array<i32>} : memref<16x1xf32, #tpu.memory_space<vmem>>, vector<16x1xf32>,
    %c0_i32_9 = arith.constant 0 : i32
    %20 = arith.cmpi eq, %arg1, %c0_i32_9 : i32
    %21 = arith.extui %20 : i1 to i32
    %c0_i32_10 = arith.constant 0 : i32
    %22 = arith.cmpi ne, %21, %c0_i32_10 : i32
    scf.if %22 {
      %23 = tpu.iota {dimensions = array<i32: 0>} : vector<16x1xi32>
      %c16_i32 = arith.constant 16 : i32
      %24 = arith.muli %arg0, %c16_i32 : i32
      %25 = vector.broadcast %24 : i32 to vector<16x1xi32>
      %26 = arith.addi %23, %25 : vector<16x1xi32>
      %c16_i32_11 = arith.constant 16 : i32
      %27 = vector.broadcast %c16_i32_11 : i32 to vector<16x1xi32>
      %28 = arith.cmpi slt, %26, %27 : vector<16x1xi32>
      %c0_12 = arith.constant 0 : index
      %c0_13 = arith.constant 0 : index
      %29 = vector.load %arg6[%c0_12, %c0_13] : memref<16x1xf32, #tpu.memory_space<vmem>>, vector<16x1xf32>
      %c0_14 = arith.constant 0 : index
      %c0_15 = arith.constant 0 : index
      %30 = vector.load %arg4[%c0_14, %c0_15] : memref<16x1xf32, #tpu.memory_space<vmem>>, vector<16x1xf32>
      %31 = arith.mulf %29, %30 : vector<16x1xf32>
      %cst_16 = arith.constant 0.000000e+00 : f32
      %32 = vector.broadcast %cst_16 : f32 to vector<16x1xf32>
      %33 = arith.select %28, %31, %32 : vector<16x1xi1>, vector<16x1xf32>
      %34 = vector.shape_cast %33 : vector<16x1xf32> to vector<1x16x1xf32>
      %cst_17 = arith.constant dense<0.000000e+00> : vector<1xf32>
      %35 = vector.multi_reduction <add>, %34, %cst_17 [1, 2] : vector<1x16x1xf32> to vector<1xf32>
      %36 = vector.shape_cast %35 : vector<1xf32> to vector<1x1x1xf32>
      %37 = vector.extract %36[0, 0, 0] : f32 from vector<1x1x1xf32>
      %38 = vector.broadcast %37 : f32 to vector<1x8x128xf32>
      %c0_18 = arith.constant 0 : index
      %c0_19 = arith.constant 0 : index
      %c0_20 = arith.constant 0 : index
      %39 = vector.load %arg5[%c0_18, %c0_19, %c0_20] : memref<1x8x128xf32, #tpu.memory_space<vmem>>, vector<1x8x128xf32>
      tpu.vector_store %arg5[%c0_18, %c0_19, %c0_20], %38 {strides = array<i32>} : memref<1x8x128xf32, #tpu.memory_space<vmem>>, vector<1x8x128xf32>,
    } else {
    }
    return
  }
  func.func @transform_0(%arg0: i32, %arg1: i32) -> (i32, i32) {
    %c0_i32 = arith.constant 0 : i32
    return %arg0, %arg1 : i32, i32
  }
  func.func @transform_1(%arg0: i32, %arg1: i32) -> (i32, i32) {
    %c0_i32 = arith.constant 0 : i32
    %c0_i32_0 = arith.constant 0 : i32
    return %arg0, %c0_i32 : i32, i32
  }
  func.func @transform_2(%arg0: i32, %arg1: i32) -> (i32, i32) {
    %c0_i32 = arith.constant 0 : i32
    %c0_i32_0 = arith.constant 0 : i32
    return %arg0, %c0_i32 : i32, i32
  }
  func.func @transform_3(%arg0: i32, %arg1: i32) -> (i32, i32, i32) {
    %c0_i32 = arith.constant 0 : i32
    %c0_i32_0 = arith.constant 0 : i32
    %c0_i32_1 = arith.constant 0 : i32
    return %arg0, %c0_i32, %c0_i32_0 : i32, i32, i32
  }
}

</mosaic_0001>

<llo_original>
// kernel: tpu_custom_call.1
$region0: #{tpu_custom_call.1}
  #allocation0 [shape = 'u32[]', space=smem, size = 0x4, offset = 0x4, fixed_abs, tag = 'smem constant byte address 0x4 - core index']
  #allocation1 [shape = 'u32[144,128]{1,0:T(1,128)}', space=vmem, size = 0x12000, scoped, tag = 'internal scratch']
  #allocation2 [shape = 'f32[16,1]{1,0:T(8,128)}', space=vmem, size = 0x2000, scoped, tag = 'scratch operand']
  %s0 = inlined_call_operand.vmem [shape: f32[16,32], index: 0, kind: input, shape index: {}]
  %s1 = inlined_call_operand.vmem [shape: s32[16,1], index: 1, kind: input, shape index: {}]
  %s2 = inlined_call_operand.vmem [shape: f32[16,1], index: 2, kind: input, shape index: {}]
  %s3 = inlined_call_operand.hbm [shape: f32[1,8,128], index: 3, kind: output, shape index: {}]
  %s4 = sld [smem:[#allocation0]]
  $region30: #{tpu_custom_call.1} parent=0
    _
  %s6 = ssub.s32 1, %s4
  %s7 = scalar_select 0, %s6, %s4
  $region1: #{tpu_custom_call.1} parent=0
    #allocation3 [shape = 'u8[4096]{0}', space=vmem, size = 0x1000, scoped, tag = 'output window, operand 0, single buffered']
    #allocation4 [shape = 's32[1]{0}', space=sflag, size = 0x4, scoped, tag = 'scoped memory for tpu_custom_call.1']
    %8 = vsyncpa [#allocation4], 0
    // Predicated region
    $region2: #{tpu_custom_call.1} parent=1 // pred_check
      _
    $region3: #{tpu_custom_call.1} parent=1 // pred_check_branch
      %10 = sbr.rel (0) target = $region5
    $region4: #{tpu_custom_call.1} parent=1 // pred_region
      _
    $region5: #{tpu_custom_call.1} parent=1 // pred_fallthru
      _
    // Predicated region
    $region6: #{tpu_custom_call.1} parent=1 // pred_check
      _
    $region7: #{tpu_custom_call.1} parent=1 // pred_check_branch
      %12 = sbr.rel (0) target = $region9
    $region8: #{tpu_custom_call.1} parent=1 // pred_region
      _
    $region9: #{tpu_custom_call.1} parent=1 // pred_fallthru
      _
    // Predicated region
    $region10: #{tpu_custom_call.1} parent=1 // pred_check
      _
    $region11: #{tpu_custom_call.1} parent=1 // pred_check_branch
      %14 = sbr.rel (0) target = $region13
    $region12: #{tpu_custom_call.1} parent=1 // pred_region
      _
    $region13: #{tpu_custom_call.1} parent=1 // pred_fallthru
      _
    %p15 = scmp.eq.s32.totalorder 0, 0
    // Predicated region
    $region14: #{tpu_custom_call.1} parent=1 // pred_check
      %p16 = pneg %p15
    $region15: #{tpu_custom_call.1} parent=1 // pred_check_branch
      %18 = sbr.rel (%p16) target = $region17
    $region16: #{tpu_custom_call.1} parent=1 // pred_region
      %vm19 = vcmask 7168
      %20 = vst.msk [vmem:[#allocation2] sm:$0xff] %vm19, 0.0
      %21 = vst.msk [vmem:[#allocation2 + $0x8] sm:$0xff] %vm19, 0.0
    $region17: #{tpu_custom_call.1} parent=1 // pred_fallthru
      _
    %v22 = vld [vmem:[%s0] sm:$0xff]
    %v23 = vld [vmem:[%s0 + $0x8] sm:$0xff]
    %v24 = vld [vmem:[%s1] sm:$0xff]
    %v25 = vld [vmem:[%s1 + $0x8] sm:$0xff]
    %s26 = smul.u32 0, 32
    %v27 = vstv %s26
    %v28 = vsub.s32 %v24, %v27
    %v29 = vsub.s32 %v25, %v27
    %v30 = vlaneseq
    %v31 = vand.u32 %v30, 127
    %32 = vset.pattern.permute.xlu0 0
    %33 = vperm.xlu0 %32, %v28
    %v34 = vpop.permute.xlu0 %33
    %35 = vset.pattern.permute.xlu0 0
    %36 = vperm.xlu0 %35, %v29
    %v37 = vpop.permute.xlu0 %36
    %vm38 = vcmp.eq.s32.totalorder %v31, %v34
    %vm39 = vcmp.eq.s32.totalorder %v31, %v37
    %v40 = vsel %vm38, %v22, 0.0
    %v41 = vsel %vm39, %v23, 0.0
    %vm42 = vcmask 261120
    %v43 = vsel %vm42, %v40, 0.0
    %44 = vadd.xlane.f32.xlu0 %v43
    %v45 = vpop.xlane.xlu0 %44
    %v46 = vsel %vm42, %v41, 0.0
    %47 = vadd.xlane.f32.xlu0 %v46
    %v48 = vpop.xlane.xlu0 %47
    %v49 = vld [vmem:[#allocation2] sm:$0xff]
    %v50 = vld [vmem:[#allocation2 + $0x8] sm:$0xff]
    %v51 = vadd.f32 %v49, %v45
    %v52 = vadd.f32 %v50, %v48
    %vm53 = vcmask 7168
    %54 = vst.msk [vmem:[#allocation2] sm:$0xff] %vm53, %v51
    %55 = vst.msk [vmem:[#allocation2 + $0x8] sm:$0xff] %vm53, %v52
    // Predicated region
    $region18: #{tpu_custom_call.1} parent=1 // pred_check
      %p56 = pneg %p15
    $region19: #{tpu_custom_call.1} parent=1 // pred_check_branch
      %58 = sbr.rel (%p56) target = $region21
    $region20: #{tpu_custom_call.1} parent=1 // pred_region
      %v59 = vlaneseq
      %v60 = vshrl.u32 %v59, 7
      %v61 = vadd.s32 %v60, 8
      %s62 = smul.u32 0, 16
      %v63 = vstv %s62
      %v64 = vadd.s32 %v60, %v63
      %v65 = vadd.s32 %v61, %v63
      %vm66 = vcmp.lt.s32.totalorder %v64, 16
      %vm67 = vcmp.lt.s32.totalorder %v65, 16
      %v68 = vld [vmem:[#allocation2] sm:$0xff]
      %v69 = vld [vmem:[#allocation2 + $0x8] sm:$0xff]
      %v70 = vld [vmem:[%s2] sm:$0xff]
      %v71 = vld [vmem:[%s2 + $0x8] sm:$0xff]
      %v72 = vmul.f32 %v68, %v70
      %v73 = vmul.f32 %v69, %v71
      %v74 = vsel %vm66, %v72, 0.0
      %v75 = vsel %vm67, %v73, 0.0
      %v76 = vsel %vm53, %v74, 0.0
      %v77 = vsel %vm53, %v75, 0.0
      %v78 = vadd.f32 %v76, %v77
      %79 = vadd.xlane.f32.xlu0 %v78
      %v80 = vpop.xlane.xlu0 %79
      %v81 = vrot.slane %v80, 4
      %v82 = vadd.f32 %v80, %v81
      %v83 = vrot.slane %v82, 2
      %v84 = vadd.f32 %v82, %v83
      %v85 = vrot.slane %v84, 1
      %v86 = vadd.f32 %v84, %v85
      %s87 = vtos %v86
      %v88 = vstv %s87
      %89 = vst [vmem:[#allocation3] sm:$0xff] %v88
    $region21: #{tpu_custom_call.1} parent=1 // pred_fallthru
      _
    // Predicated region
    $region22: #{tpu_custom_call.1} parent=1 // pred_check
      _
    $region23: #{tpu_custom_call.1} parent=1 // pred_check_branch
      %91 = sbr.rel (0) target = $region25
    $region24: #{tpu_custom_call.1} parent=1 // pred_region
      %s93 = ssub.s32 128, 128
      %94 = vsyncadd [#allocation4], %s93
      %s96 = sshll.u32 [#allocation3], 4
      %s97 = int_to_ptr.vmem [resolvable:$true] %s96
      %99 = dma.vmem_to_hbm [thread:$0]  %s97, 128, %s3, [#allocation4]
    $region25: #{tpu_custom_call.1} parent=1 // pred_fallthru
      _
    // Predicated region
    $region26: #{tpu_custom_call.1} parent=1 // pred_check
      _
    $region27: #{tpu_custom_call.1} parent=1 // pred_check_branch
      %101 = sbr.rel (0) target = $region29
    $region28: #{tpu_custom_call.1} parent=1 // pred_region
      %102 = dma.done [#allocation4], 128
    $region29: #{tpu_custom_call.1} parent=1 // pred_fallthru
      _
    %103 = vsyncpa [#allocation4], 1

</llo_original>
